<compile_context>
chip_gen: v5e
topology: v5e:2x2
jax: 0.10.0
libtpu: 0.0.40
codegen_flags: <defaults>
</compile_context>

<pallas_src>
import functools

import jax
import jax.numpy as jnp
import numpy as np
from jax.experimental import pallas as pl
from jax.experimental.pallas import tpu as pltpu

# ----------------------------- hyperparameters ---------------------------------
N         = 2                     # example batch (kernel itself is batch-generic)
C_IN      = 4                     # in_channels
H = W     = 16                    # grid spatial size
K         = 3                     # stand-in conv kernel size
N_ACTIONS = 8
SCENE_NUM = 10
TASK_NUM  = 10
FEAT_DIM  = 128
SCENE_DIM = 16
TASK_DIM  = 16
EMBED_DIM = 16                    # must equal scene_dim/task_dim for the scores
assert EMBED_DIM == SCENE_DIM == TASK_DIM

OUT_CH    = FEAT_DIM // (2 * 2)                 # backbone conv channels (32)
PATCH_K   = 64                                  # im2col K padded 36 -> 64
POOL_ROWS = (H // 2) * (W // 2)                 # rows averaged per pooled value
EPS       = 1e-12                               # F.normalize eps

# merged-fc1 operand columns: [ y(32) | onehot_scene(10) | onehot_task(10) | 0-pad ]
IN_OP_DIM = 64
ROW_S     = 2 * EMBED_DIM                       # 32
ROW_T     = ROW_S + SCENE_NUM                   # 42

# merged-fc1 output columns (= merged output-matmul rows)
HC_POL  = 0
HC_REW  = FEAT_DIM                              # 128
HC_SRE  = 2 * FEAT_DIM                          # 256
HC_TRE  = HC_SRE + 4 * EMBED_DIM                # 320
W1_COLS = HC_TRE + 4 * EMBED_DIM                # 384

# lane-dense output slab columns
OUT_LANES = 128
OC_POL = 0
OC_REW = N_ACTIONS
OC_SS  = 2 * N_ACTIONS
OC_TS  = OC_SS + SCENE_NUM


# ------------------------------ fused kernel -----------------------------------
def _fused_forward_kernel(patches_ref, ids_ref, pool_ref, wcs_ref, w1_ref, w2_ref,
                          b_ref, out_ref):
    n = ids_ref.shape[0]                         # batch size from traced shapes

    def mmb(a, b):                               # bf16 MXU operands, f32 accumulation
        return jnp.dot(a.astype(jnp.bfloat16), b.astype(jnp.bfloat16),
                       preferred_element_type=jnp.float32)

    def l2norm(x):                               # F.normalize: x / max(||x||, EPS)
        ss = jnp.sum(x * x, axis=1, keepdims=True)
        return x * jax.lax.rsqrt(jnp.maximum(ss, EPS * EPS))

    # 1) backbone stand-in: 3x3 'same' conv as ONE im2col matmul (K padded to 64)
    conv = mmb(patches_ref[...], wcs_ref[0:PATCH_K, 0:OUT_CH]) + b_ref[0:1, 0:OUT_CH]
    conv = jnp.maximum(conv, 0.0)                                    # (n*H*W, 32) f32

    # 2) adaptive avg-pool to 2x2: ONE constant-mask matmul, kept in f32
    pooled = jnp.dot(pool_ref[...], conv,
                     preferred_element_type=jnp.float32)             # (4n, 32)

    # 3) state_fc: lane-concat the 4 pooled regions -> (n, 128), then ONE matmul
    y_in = jnp.concatenate([pooled[r * n:(r + 1) * n, :] for r in range(4)], axis=1)
    y = l2norm(mmb(y_in, wcs_ref[0:FEAT_DIM, OUT_CH:2 * OUT_CH])
               + b_ref[1:2, 0:2 * EMBED_DIM])                        # (n, 32)

    # 4) embedding lookup folded into the merged fc1 matmul via one-hot columns
    sid = ids_ref[:, 0:1]
    tid = ids_ref[:, 1:2]
    oh_s = (jax.lax.broadcasted_iota(jnp.int32, (n, SCENE_NUM), 1) == sid
            ).astype(jnp.float32)
    oh_t = (jax.lax.broadcasted_iota(jnp.int32, (n, TASK_NUM), 1) == tid
            ).astype(jnp.float32)
    pad = jnp.zeros((n, IN_OP_DIM - ROW_T - TASK_NUM), jnp.float32)
    in_op = jnp.concatenate([y, oh_s, oh_t, pad], axis=1)            # (n, 64)

    # 5) merged fc1: [policy_fc1 | reward_fc1 | scene_refc1 | task_refc1] -> ONE matmul
    h = jnp.maximum(mmb(in_op, w1_ref[...]) + b_ref[2:3, :], 0.0)    # (n, 384)

    # 6) merged heads: policy_fc2 / reward_fc2 / (refc2 @ embed.T pre-folded) ->
    #    ONE matmul into the lane-dense output slab
    out_ref[...] = mmb(h, w2_ref[...]) + b_ref[3:4, 0:OUT_LANES]     # (n, 128)


# ------------------------------- glue / wrapper ---------------------------------
def _full_spec(shape):
    nd = len(shape)
    return pl.BlockSpec(tuple(int(s) for s in shape), lambda i, _nd=nd: (0,) * _nd)


@functools.lru_cache(maxsize=None)
def _pool_mask(n):
    """Constant (4n, n*H*W) mask: row (region, b) averages the 64 conv rows of
    batch b falling in pool region (ph, pw) = (region//2, region%2)."""
    m = np.zeros((4 * n, n * H * W), np.float32)
    for r in range(4):
        ph, pw = r // 2, r % 2
        for b in range(n):
            for hh in range(ph * (H // 2), (ph + 1) * (H // 2)):
                for ww in range(pw * (W // 2), (pw + 1) * (W // 2)):
                    m[r * n + b, b * H * W + hh * W + ww] = 1.0 / POOL_ROWS
    return m


@jax.jit
def grid_world_mlp_forward(packed, x_nchw, scene_ids, task_ids):
    n = x_nchw.shape[0]
    x = jnp.transpose(x_nchw, (0, 2, 3, 1)).astype(jnp.float32)       # NCHW -> NHWC
    xp = jnp.pad(x, ((0, 0), (1, 1), (1, 1), (0, 0)))
    cols = [xp[:, dh:dh + H, dw:dw + W, :] for dh in range(K) for dw in range(K)]
    patches = jnp.concatenate(cols, axis=-1).reshape(n * H * W, K * K * C_IN)
    patches = jnp.pad(patches, ((0, 0), (0, PATCH_K - K * K * C_IN))
                      ).astype(jnp.bfloat16)                          # (n*H*W, 64)
    ids = jnp.stack([scene_ids.astype(jnp.int32),
                     task_ids.astype(jnp.int32)], axis=1)             # (n, 2)
    pool = jnp.asarray(_pool_mask(n))                                 # constant

    inputs = (patches, ids, pool, packed['wcs'], packed['w1'], packed['w2'],
              packed['b'])
    out = pl.pallas_call(
        _fused_forward_kernel,
        out_shape=jax.ShapeDtypeStruct((n, OUT_LANES), jnp.float32),
        grid=(1,),
        in_specs=[_full_spec(a.shape) for a in inputs],
        out_specs=_full_spec((n, OUT_LANES)),
        compiler_params=pltpu.CompilerParams(dimension_semantics=("arbitrary",)),
    )(*inputs)

    return (out[:, OC_POL:OC_POL + N_ACTIONS],
            out[:, OC_REW:OC_REW + N_ACTIONS],
            out[:, OC_SS:OC_SS + SCENE_NUM],
            out[:, OC_TS:OC_TS + TASK_NUM])


# -------------------------------- parameters ------------------------------------
def init_params(key):
    keys = iter(jax.random.split(key, 32))

    def lin(in_dim, out_dim):
        bound = 1.0 / float(in_dim) ** 0.5
        w = jax.random.uniform(next(keys), (in_dim, out_dim), jnp.float32, -bound, bound)
        b = jax.random.uniform(next(keys), (1, out_dim), jnp.float32, -bound, bound)
        return w, b

    p = {}
    p['conv_w'], p['conv_b'] = lin(K * K * C_IN, OUT_CH)
    p['scene_embed'] = jax.random.normal(next(keys), (SCENE_NUM, SCENE_DIM), jnp.float32)
    p['task_embed'] = jax.random.normal(next(keys), (TASK_NUM, TASK_DIM), jnp.float32)
    p['state_w'], p['state_b'] = lin(FEAT_DIM, 2 * EMBED_DIM)
    p['pol1_w'], p['pol1_b'] = lin(IN_OP_DIM, FEAT_DIM)
    p['pol2_w'], p['pol2_b'] = lin(FEAT_DIM, N_ACTIONS)
    p['rew1_w'], p['rew1_b'] = lin(IN_OP_DIM, FEAT_DIM)
    p['rew2_w'], p['rew2_b'] = lin(FEAT_DIM, N_ACTIONS)
    p['sre1_w'], p['sre1_b'] = lin(2 * EMBED_DIM, 4 * EMBED_DIM)
    p['sre2_w'], p['sre2_b'] = lin(4 * EMBED_DIM, EMBED_DIM)
    p['tre1_w'], p['tre1_b'] = lin(2 * EMBED_DIM, 4 * EMBED_DIM)
    p['tre2_w'], p['tre2_b'] = lin(4 * EMBED_DIM, EMBED_DIM)
    return p


def pack_params(p):
    """One-time packing: conv+state block, merged fc1 (with the normalized
    embedding tables pre-multiplied in), merged output (with refc2 @ embed.T
    pre-multiplied in), and all biases."""
    def l2rows(t):
        nrm = jnp.sqrt(jnp.sum(t * t, axis=1, keepdims=True))
        return t / jnp.maximum(nrm, EPS)

    sn = l2rows(p['scene_embed'])                           # normalized (in_feat path)
    tn = l2rows(p['task_embed'])

    # conv (rows 0:36 of 64, cols 0:32) + state_fc (rows 0:128, cols 32:64)
    wcs = jnp.zeros((FEAT_DIM, 2 * OUT_CH), jnp.float32)
    wcs = wcs.at[0:K * K * C_IN, 0:OUT_CH].set(p['conv_w'])
    wcs = wcs.at[0:FEAT_DIM, OUT_CH:2 * OUT_CH].set(p['state_w'])

    # merged fc1: operand rows [y | onehot_scene | onehot_task | pad]
    w1 = jnp.zeros((IN_OP_DIM, W1_COLS), jnp.float32)
    w1 = w1.at[0:ROW_S, HC_POL:HC_POL + FEAT_DIM].set(p['pol1_w'][0:32])
    w1 = w1.at[ROW_S:ROW_S + SCENE_NUM, HC_POL:HC_POL + FEAT_DIM].set(sn @ p['pol1_w'][32:48])
    w1 = w1.at[ROW_T:ROW_T + TASK_NUM, HC_POL:HC_POL + FEAT_DIM].set(tn @ p['pol1_w'][48:64])
    w1 = w1.at[0:ROW_S, HC_REW:HC_REW + FEAT_DIM].set(p['rew1_w'][0:32])
    w1 = w1.at[ROW_S:ROW_S + SCENE_NUM, HC_REW:HC_REW + FEAT_DIM].set(sn @ p['rew1_w'][32:48])
    w1 = w1.at[ROW_T:ROW_T + TASK_NUM, HC_REW:HC_REW + FEAT_DIM].set(tn @ p['rew1_w'][48:64])
    w1 = w1.at[0:ROW_S, HC_SRE:HC_SRE + 4 * EMBED_DIM].set(p['sre1_w'])
    w1 = w1.at[0:ROW_S, HC_TRE:HC_TRE + 4 * EMBED_DIM].set(p['tre1_w'])

    # merged output: pol2 / rew2 block-diag, refc2 pre-multiplied by embed tables
    w2 = jnp.zeros((W1_COLS, OUT_LANES), jnp.float32)
    w2 = w2.at[HC_POL:HC_POL + FEAT_DIM, OC_POL:OC_POL + N_ACTIONS].set(p['pol2_w'])
    w2 = w2.at[HC_REW:HC_REW + FEAT_DIM, OC_REW:OC_REW + N_ACTIONS].set(p['rew2_w'])
    w2 = w2.at[HC_SRE:HC_SRE + 4 * EMBED_DIM,
               OC_SS:OC_SS + SCENE_NUM].set(p['sre2_w'] @ p['scene_embed'].T)
    w2 = w2.at[HC_TRE:HC_TRE + 4 * EMBED_DIM,
               OC_TS:OC_TS + TASK_NUM].set(p['tre2_w'] @ p['task_embed'].T)

    b = jnp.zeros((4, W1_COLS), jnp.float32)
    b = b.at[0, 0:OUT_CH].set(p['conv_b'][0])
    b = b.at[1, 0:2 * EMBED_DIM].set(p['state_b'][0])
    b = b.at[2, HC_POL:HC_POL + FEAT_DIM].set(p['pol1_b'][0])
    b = b.at[2, HC_REW:HC_REW + FEAT_DIM].set(p['rew1_b'][0])
    b = b.at[2, HC_SRE:HC_SRE + 4 * EMBED_DIM].set(p['sre1_b'][0])
    b = b.at[2, HC_TRE:HC_TRE + 4 * EMBED_DIM].set(p['tre1_b'][0])
    b = b.at[3, OC_POL:OC_POL + N_ACTIONS].set(p['pol2_b'][0])
    b = b.at[3, OC_REW:OC_REW + N_ACTIONS].set(p['rew2_b'][0])
    b = b.at[3, OC_SS:OC_SS + SCENE_NUM].set((p['sre2_b'] @ p['scene_embed'].T)[0])
    b = b.at[3, OC_TS:OC_TS + TASK_NUM].set((p['tre2_b'] @ p['task_embed'].T)[0])

    return {'wcs': wcs.astype(jnp.bfloat16), 'w1': w1.astype(jnp.bfloat16),
            'w2': w2.astype(jnp.bfloat16), 'b': b}


# ----------------------- pure-JAX f32 reference for validation -------------------
def reference_forward(params, x_nchw, scene_ids, task_ids):
    x = jnp.transpose(x_nchw, (0, 2, 3, 1)).astype(jnp.float32)
    n, h, w, _ = x.shape
    xp = jnp.pad(x, ((0, 0), (1, 1), (1, 1), (0, 0)))
    cols = [xp[:, dh:dh + h, dw:dw + w, :] for dh in range(K) for dw in range(K)]
    patches = jnp.concatenate(cols, axis=-1)                          # (n, h, w, 36)
    conv = jnp.maximum(patches @ params['conv_w'] + params['conv_b'][0], 0.0)
    pooled = conv.reshape(n, 2, h // 2, 2, w // 2, OUT_CH).mean(axis=(2, 4))
    y_state = pooled.reshape(n, FEAT_DIM)                             # (ph, pw, c) order

    def l2n(v):
        nrm = jnp.sqrt(jnp.sum(v * v, axis=1, keepdims=True))
        return v / jnp.maximum(nrm, EPS)

    scene_e = l2n(params['scene_embed'][scene_ids])
    task_e = l2n(params['task_embed'][task_ids])
    y = l2n(y_state @ params['state_w'] + params['state_b'])
    in_feat = jnp.concatenate([y, scene_e, task_e], axis=1)
    pol_h = jnp.maximum(in_feat @ params['pol1_w'] + params['pol1_b'], 0.0)
    rew_h = jnp.maximum(in_feat @ params['rew1_w'] + params['rew1_b'], 0.0)
    rs = jnp.maximum(y @ params['sre1_w'] + params['sre1_b'], 0.0) @ params['sre2_w'] + params['sre2_b']
    rt = jnp.maximum(y @ params['tre1_w'] + params['tre1_b'], 0.0) @ params['tre2_w'] + params['tre2_b']
    return (pol_h @ params['pol2_w'] + params['pol2_b'],
            rew_h @ params['rew2_w'] + params['rew2_b'],
            rs @ params['scene_embed'].T,
            rt @ params['task_embed'].T)


# --------------------------------------- main ------------------------------------
if __name__ == "__main__":
    key = jax.random.PRNGKey(0)
    kp, kx = jax.random.split(key)
    params = init_params(kp)
    packed = pack_params(params)                 # weight packing / folding: done once

    x = jax.random.normal(kx, (N, C_IN, H, W), jnp.float32)      # PyTorch NCHW input
    scene_ids = jnp.array([1, 3], dtype=jnp.int32)
    task_ids = jnp.array([0, 7], dtype=jnp.int32)

    outs = grid_world_mlp_forward(packed, x, scene_ids, task_ids)
    outs = jax.block_until_ready(outs)

    refs = reference_forward(params, x, scene_ids, task_ids)
    names = ("policy", "reward", "scene_score", "task_score")
    # tolerance: bf16 MXU operands with f32 accumulation vs. an all-f32 reference
    for name, o, r in zip(names, outs, refs):
        assert o.shape == r.shape, (name, o.shape, r.shape)
        assert jnp.allclose(o, r, atol=2e-2, rtol=2e-2), (
            name, float(jnp.max(jnp.abs(o - r))))

    print("KERNEL_OK")
</pallas_src>

<mosaic_0001>
module attributes {stable_mosaic.version = 11 : i64} {
  func.func @_fused_forward_kernel(%arg0: i32, %arg1: memref<512x64xbf16, #tpu.memory_space<vmem>>, %arg2: memref<2x2xi32, #tpu.memory_space<vmem>>, %arg3: memref<8x512xf32, #tpu.memory_space<vmem>>, %arg4: memref<128x64xbf16, #tpu.memory_space<vmem>>, %arg5: memref<64x384xbf16, #tpu.memory_space<vmem>>, %arg6: memref<384x128xbf16, #tpu.memory_space<vmem>>, %arg7: memref<4x384xf32, #tpu.memory_space<vmem>>, %arg8: memref<2x128xf32, #tpu.memory_space<vmem>>) attributes {dimension_semantics = [#tpu.dimension_semantics<arbitrary>], iteration_bounds = array<i64: 1>, scalar_prefetch = 0 : i64, scratch_operands = 0 : i64, tpu.core_type = #tpu.core_type<tc>, window_params = [{pipeline_mode = #tpu.pipeline_mode<synchronous>, transform_indices = @transform_0, window_bounds = array<i64: 512, 64>}, {pipeline_mode = #tpu.pipeline_mode<synchronous>, transform_indices = @transform_1, window_bounds = array<i64: 2, 2>}, {pipeline_mode = #tpu.pipeline_mode<synchronous>, transform_indices = @transform_2, window_bounds = array<i64: 8, 512>}, {pipeline_mode = #tpu.pipeline_mode<synchronous>, transform_indices = @transform_3, window_bounds = array<i64: 128, 64>}, {pipeline_mode = #tpu.pipeline_mode<synchronous>, transform_indices = @transform_4, window_bounds = array<i64: 64, 384>}, {pipeline_mode = #tpu.pipeline_mode<synchronous>, transform_indices = @transform_5, window_bounds = array<i64: 384, 128>}, {pipeline_mode = #tpu.pipeline_mode<synchronous>, transform_indices = @transform_6, window_bounds = array<i64: 4, 384>}, {pipeline_mode = #tpu.pipeline_mode<synchronous>, transform_indices = @transform_7, window_bounds = array<i64: 2, 128>}]} {
    %c0 = arith.constant 0 : index
    %c0_0 = arith.constant 0 : index
    %0 = vector.load %arg1[%c0, %c0_0] : memref<512x64xbf16, #tpu.memory_space<vmem>>, vector<512x64xbf16>
    %c0_1 = arith.constant 0 : index
    %c0_2 = arith.constant 0 : index
    %1 = vector.load %arg4[%c0_1, %c0_2] : memref<128x64xbf16, #tpu.memory_space<vmem>>, vector<64x32xbf16>
    %cst = arith.constant dense<0.000000e+00> : vector<512x32xf32>
    %2 = tpu.matmul %0, %1, %cst {dimension_numbers = #tpu.dot_dimension_numbers<[1], [0], [0], [1], [0, 0, 1, 1], [], []>} : vector<512x64xbf16>, vector<64x32xbf16>, vector<512x32xf32> -> vector<512x32xf32>
    %c0_3 = arith.constant 0 : index
    %c0_4 = arith.constant 0 : index
    %3 = vector.load %arg7[%c0_3, %c0_4] : memref<4x384xf32, #tpu.memory_space<vmem>>, vector<1x32xf32>
    %4 = vector.broadcast %3 : vector<1x32xf32> to vector<512x32xf32>
    %5 = arith.addf %2, %4 : vector<512x32xf32>
    %cst_5 = arith.constant 0.000000e+00 : f32
    %6 = vector.broadcast %cst_5 : f32 to vector<512x32xf32>
    %7 = arith.maximumf %5, %6 : vector<512x32xf32>
    %c0_6 = arith.constant 0 : index
    %c0_7 = arith.constant 0 : index
    %8 = vector.load %arg3[%c0_6, %c0_7] : memref<8x512xf32, #tpu.memory_space<vmem>>, vector<8x512xf32>
    %cst_8 = arith.constant dense<0.000000e+00> : vector<8x32xf32>
    %9 = tpu.matmul %8, %7, %cst_8 {dimension_numbers = #tpu.dot_dimension_numbers<[1], [0], [0], [1], [0, 0, 1, 1], [], []>} : vector<8x512xf32>, vector<512x32xf32>, vector<8x32xf32> -> vector<8x32xf32>
    %10 = vector.extract_strided_slice %9 {offsets = [0, 0], sizes = [2, 32], strides = [1, 1]} : vector<8x32xf32> to vector<2x32xf32>
    %11 = vector.extract_strided_slice %9 {offsets = [2, 0], sizes = [2, 32], strides = [1, 1]} : vector<8x32xf32> to vector<2x32xf32>
    %12 = vector.extract_strided_slice %9 {offsets = [4, 0], sizes = [2, 32], strides = [1, 1]} : vector<8x32xf32> to vector<2x32xf32>
    %13 = vector.extract_strided_slice %9 {offsets = [6, 0], sizes = [2, 32], strides = [1, 1]} : vector<8x32xf32> to vector<2x32xf32>
    %14 = tpu.concatenate %10, %11, %12, %13 in 1 : vector<2x32xf32>, vector<2x32xf32>, vector<2x32xf32>, vector<2x32xf32> -> vector<2x128xf32>
    %c0_9 = arith.constant 0 : index
    %c32 = arith.constant 32 : index
    %15 = vector.load %arg4[%c0_9, %c32] : memref<128x64xbf16, #tpu.memory_space<vmem>>, vector<128x32xbf16>
    %16 = arith.truncf %14 : vector<2x128xf32> to vector<2x128xbf16>
    %cst_10 = arith.constant dense<0.000000e+00> : vector<2x32xf32>
    %17 = tpu.matmul %16, %15, %cst_10 {dimension_numbers = #tpu.dot_dimension_numbers<[1], [0], [0], [1], [0, 0, 1, 1], [], []>} : vector<2x128xbf16>, vector<128x32xbf16>, vector<2x32xf32> -> vector<2x32xf32>
    %c1 = arith.constant 1 : index
    %c0_11 = arith.constant 0 : index
    %18 = vector.load %arg7[%c1, %c0_11] : memref<4x384xf32, #tpu.memory_space<vmem>>, vector<1x32xf32>
    %19 = vector.broadcast %18 : vector<1x32xf32> to vector<2x32xf32>
    %20 = arith.addf %17, %19 : vector<2x32xf32>
    %21 = arith.mulf %20, %20 : vector<2x32xf32>
    %cst_12 = arith.constant dense<0.000000e+00> : vector<2xf32>
    %22 = vector.multi_reduction <add>, %21, %cst_12 [1] : vector<2x32xf32> to vector<2xf32>
    %23 = vector.shape_cast %22 : vector<2xf32> to vector<2x1xf32>
    %cst_13 = arith.constant 1.000000e-24 : f32
    %24 = vector.broadcast %cst_13 : f32 to vector<2x1xf32>
    %25 = arith.maximumf %23, %24 : vector<2x1xf32>
    %26 = math.rsqrt %25 : vector<2x1xf32>
    %27 = vector.broadcast %26 : vector<2x1xf32> to vector<2x32xf32>
    %28 = arith.mulf %20, %27 : vector<2x32xf32>
    %c0_14 = arith.constant 0 : index
    %c0_15 = arith.constant 0 : index
    %29 = vector.load %arg2[%c0_14, %c0_15] : memref<2x2xi32, #tpu.memory_space<vmem>>, vector<2x1xi32>
    %c0_16 = arith.constant 0 : index
    %c1_17 = arith.constant 1 : index
    %30 = vector.load %arg2[%c0_16, %c1_17] : memref<2x2xi32, #tpu.memory_space<vmem>>, vector<2x1xi32>
    %31 = tpu.iota {dimensions = array<i32: 1>} : vector<2x10xi32>
    %32 = vector.broadcast %29 : vector<2x1xi32> to vector<2x10xi32>
    %33 = arith.cmpi eq, %31, %32 : vector<2x10xi32>
    %34 = arith.extui %33 : vector<2x10xi1> to vector<2x10xi32>
    %35 = arith.sitofp %34 : vector<2x10xi32> to vector<2x10xf32>
    %36 = tpu.iota {dimensions = array<i32: 1>} : vector<2x10xi32>
    %37 = vector.broadcast %30 : vector<2x1xi32> to vector<2x10xi32>
    %38 = arith.cmpi eq, %36, %37 : vector<2x10xi32>
    %39 = arith.extui %38 : vector<2x10xi1> to vector<2x10xi32>
    %40 = arith.sitofp %39 : vector<2x10xi32> to vector<2x10xf32>
    %cst_18 = arith.constant 0.000000e+00 : f32
    %41 = vector.broadcast %cst_18 : f32 to vector<2x12xf32>
    %42 = tpu.concatenate %28, %35, %40, %41 in 1 : vector<2x32xf32>, vector<2x10xf32>, vector<2x10xf32>, vector<2x12xf32> -> vector<2x64xf32>
    %c0_19 = arith.constant 0 : index
    %c0_20 = arith.constant 0 : index
    %43 = vector.load %arg5[%c0_19, %c0_20] : memref<64x384xbf16, #tpu.memory_space<vmem>>, vector<64x384xbf16>
    %44 = arith.truncf %42 : vector<2x64xf32> to vector<2x64xbf16>
    %cst_21 = arith.constant dense<0.000000e+00> : vector<2x384xf32>
    %45 = tpu.matmul %44, %43, %cst_21 {dimension_numbers = #tpu.dot_dimension_numbers<[1], [0], [0], [1], [0, 0, 1, 1], [], []>} : vector<2x64xbf16>, vector<64x384xbf16>, vector<2x384xf32> -> vector<2x384xf32>
    %c2 = arith.constant 2 : index
    %c0_22 = arith.constant 0 : index
    %46 = vector.load %arg7[%c2, %c0_22] : memref<4x384xf32, #tpu.memory_space<vmem>>, vector<1x384xf32>
    %47 = vector.broadcast %46 : vector<1x384xf32> to vector<2x384xf32>
    %48 = arith.addf %45, %47 : vector<2x384xf32>
    %cst_23 = arith.constant 0.000000e+00 : f32
    %49 = vector.broadcast %cst_23 : f32 to vector<2x384xf32>
    %50 = arith.maximumf %48, %49 : vector<2x384xf32>
    %c0_24 = arith.constant 0 : index
    %c0_25 = arith.constant 0 : index
    %51 = vector.load %arg6[%c0_24, %c0_25] : memref<384x128xbf16, #tpu.memory_space<vmem>>, vector<384x128xbf16>
    %52 = arith.truncf %50 : vector<2x384xf32> to vector<2x384xbf16>
    %cst_26 = arith.constant dense<0.000000e+00> : vector<2x128xf32>
    %53 = tpu.matmul %52, %51, %cst_26 {dimension_numbers = #tpu.dot_dimension_numbers<[1], [0], [0], [1], [0, 0, 1, 1], [], []>} : vector<2x384xbf16>, vector<384x128xbf16>, vector<2x128xf32> -> vector<2x128xf32>
    %c3 = arith.constant 3 : index
    %c0_27 = arith.constant 0 : index
    %54 = vector.load %arg7[%c3, %c0_27] : memref<4x384xf32, #tpu.memory_space<vmem>>, vector<1x128xf32>
    %55 = vector.broadcast %54 : vector<1x128xf32> to vector<2x128xf32>
    %56 = arith.addf %53, %55 : vector<2x128xf32>
    %c0_28 = arith.constant 0 : index
    %c0_29 = arith.constant 0 : index
    %57 = vector.load %arg8[%c0_28, %c0_29] : memref<2x128xf32, #tpu.memory_space<vmem>>, vector<2x128xf32>
    tpu.vector_store %arg8[%c0_28, %c0_29], %56 {strides = array<i32>} : memref<2x128xf32, #tpu.memory_space<vmem>>, vector<2x128xf32>,
    return
  }
  func.func @transform_0(%arg0: i32) -> (i32, i32) {
    %c0_i32 = arith.constant 0 : i32
    %c0_i32_0 = arith.constant 0 : i32
    %c0_i32_1 = arith.constant 0 : i32
    return %c0_i32, %c0_i32_0 : i32, i32
  }
  func.func @transform_1(%arg0: i32) -> (i32, i32) {
    %c0_i32 = arith.constant 0 : i32
    %c0_i32_0 = arith.constant 0 : i32
    %c0_i32_1 = arith.constant 0 : i32
    return %c0_i32, %c0_i32_0 : i32, i32
  }
  func.func @transform_2(%arg0: i32) -> (i32, i32) {
    %c0_i32 = arith.constant 0 : i32
    %c0_i32_0 = arith.constant 0 : i32
    %c0_i32_1 = arith.constant 0 : i32
    return %c0_i32, %c0_i32_0 : i32, i32
  }
  func.func @transform_3(%arg0: i32) -> (i32, i32) {
    %c0_i32 = arith.constant 0 : i32
    %c0_i32_0 = arith.constant 0 : i32
    %c0_i32_1 = arith.constant 0 : i32
    return %c0_i32, %c0_i32_0 : i32, i32
  }
  func.func @transform_4(%arg0: i32) -> (i32, i32) {
    %c0_i32 = arith.constant 0 : i32
    %c0_i32_0 = arith.constant 0 : i32
    %c0_i32_1 = arith.constant 0 : i32
    return %c0_i32, %c0_i32_0 : i32, i32
  }
  func.func @transform_5(%arg0: i32) -> (i32, i32) {
    %c0_i32 = arith.constant 0 : i32
    %c0_i32_0 = arith.constant 0 : i32
    %c0_i32_1 = arith.constant 0 : i32
    return %c0_i32, %c0_i32_0 : i32, i32
  }
  func.func @transform_6(%arg0: i32) -> (i32, i32) {
    %c0_i32 = arith.constant 0 : i32
    %c0_i32_0 = arith.constant 0 : i32
    %c0_i32_1 = arith.constant 0 : i32
    return %c0_i32, %c0_i32_0 : i32, i32
  }
  func.func @transform_7(%arg0: i32) -> (i32, i32) {
    %c0_i32 = arith.constant 0 : i32
    %c0_i32_0 = arith.constant 0 : i32
    %c0_i32_1 = arith.constant 0 : i32
    return %c0_i32, %c0_i32_0 : i32, i32
  }
}

</mosaic_0001>

<llo_original>
// kernel: grid_world_mlp_forward.1
$region0: #{grid_world_mlp_forward.1}
  #allocation0 [shape = 'u32[]', space=smem, size = 0x4, offset = 0x4, fixed_abs, tag = 'smem constant byte address 0x4 - core index']
  #allocation1 [shape = 'u32[72,128]{1,0:T(1,128)}', space=vmem, size = 0x9000, scoped, tag = 'internal scratch']
  %s0 = inlined_call_operand.vmem [shape: bf16[512,64], index: 0, kind: input, shape index: {}]
  %s1 = inlined_call_operand.vmem [shape: s32[2,2], index: 1, kind: input, shape index: {}]
  %s2 = inlined_call_operand.vmem [shape: f32[8,512], index: 2, kind: input, shape index: {}]
  %s3 = inlined_call_operand.vmem [shape: bf16[128,64], index: 3, kind: input, shape index: {}]
  %s4 = inlined_call_operand.vmem [shape: bf16[64,384], index: 4, kind: input, shape index: {}]
  %s5 = inlined_call_operand.vmem [shape: bf16[384,128], index: 5, kind: input, shape index: {}]
  %s6 = inlined_call_operand.vmem [shape: f32[4,384], index: 6, kind: input, shape index: {}]
  %s7 = inlined_call_operand.vmem [shape: f32[2,128], index: 7, kind: output, shape index: {}]
  %s8 = sld [smem:[#allocation0]]
  $region38: #{grid_world_mlp_forward.1} parent=0
    _
  %s10 = ssub.s32 1, %s8
  %s11 = scalar_select 0, %s10, %s8
  // Predicated region
  $region2: #{grid_world_mlp_forward.1} parent=0 // pred_check
    _
  $region3: #{grid_world_mlp_forward.1} parent=0 // pred_check_branch
    %13 = sbr.rel (0) target = $region5
  $region4: #{grid_world_mlp_forward.1} parent=0 // pred_region
    _
  $region5: #{grid_world_mlp_forward.1} parent=0 // pred_fallthru
    _
  // Predicated region
  $region6: #{grid_world_mlp_forward.1} parent=0 // pred_check
    _
  $region7: #{grid_world_mlp_forward.1} parent=0 // pred_check_branch
    %15 = sbr.rel (0) target = $region9
  $region8: #{grid_world_mlp_forward.1} parent=0 // pred_region
    _
  $region9: #{grid_world_mlp_forward.1} parent=0 // pred_fallthru
    _
  // Predicated region
  $region10: #{grid_world_mlp_forward.1} parent=0 // pred_check
    _
  $region11: #{grid_world_mlp_forward.1} parent=0 // pred_check_branch
    %17 = sbr.rel (0) target = $region13
  $region12: #{grid_world_mlp_forward.1} parent=0 // pred_region
    _
  $region13: #{grid_world_mlp_forward.1} parent=0 // pred_fallthru
    _
  // Predicated region
  $region14: #{grid_world_mlp_forward.1} parent=0 // pred_check
    _
  $region15: #{grid_world_mlp_forward.1} parent=0 // pred_check_branch
    %19 = sbr.rel (0) target = $region17
  $region16: #{grid_world_mlp_forward.1} parent=0 // pred_region
    _
  $region17: #{grid_world_mlp_forward.1} parent=0 // pred_fallthru
    _
  // Predicated region
  $region18: #{grid_world_mlp_forward.1} parent=0 // pred_check
    _
  $region19: #{grid_world_mlp_forward.1} parent=0 // pred_check_branch
    %21 = sbr.rel (0) target = $region21
  $region20: #{grid_world_mlp_forward.1} parent=0 // pred_region
    _
  $region21: #{grid_world_mlp_forward.1} parent=0 // pred_fallthru
    _
  // Predicated region
  $region22: #{grid_world_mlp_forward.1} parent=0 // pred_check
    _
  $region23: #{grid_world_mlp_forward.1} parent=0 // pred_check_branch
    %23 = sbr.rel (0) target = $region25
  $region24: #{grid_world_mlp_forward.1} parent=0 // pred_region
    _
  $region25: #{grid_world_mlp_forward.1} parent=0 // pred_fallthru
    _
  // Predicated region
  $region26: #{grid_world_mlp_forward.1} parent=0 // pred_check
    _
  $region27: #{grid_world_mlp_forward.1} parent=0 // pred_check_branch
    %25 = sbr.rel (0) target = $region29
  $region28: #{grid_world_mlp_forward.1} parent=0 // pred_region
    _
  $region29: #{grid_world_mlp_forward.1} parent=0 // pred_fallthru
    _
  %v27 = vld [vmem:[%s0] sm:$0xf]
  %v28 = vld [vmem:[%s0 + $0x4] sm:$0xf]
  %v29 = vld [vmem:[%s0 + $0x8] sm:$0xf]
  %v30 = vld [vmem:[%s0 + $0xc] sm:$0xf]
  %v31 = vld [vmem:[%s0 + $0x10] sm:$0xf]
  %v32 = vld [vmem:[%s0 + $0x14] sm:$0xf]
  %v33 = vld [vmem:[%s0 + $0x18] sm:$0xf]
  %v34 = vld [vmem:[%s0 + $0x1c] sm:$0xf]
  %v35 = vld [vmem:[%s0 + $0x20] sm:$0xf]
  %v36 = vld [vmem:[%s0 + $0x24] sm:$0xf]
  %v37 = vld [vmem:[%s0 + $0x28] sm:$0xf]
  %v38 = vld [vmem:[%s0 + $0x2c] sm:$0xf]
  %v39 = vld [vmem:[%s0 + $0x30] sm:$0xf]
  %v40 = vld [vmem:[%s0 + $0x34] sm:$0xf]
  %v41 = vld [vmem:[%s0 + $0x38] sm:$0xf]
  %v42 = vld [vmem:[%s0 + $0x3c] sm:$0xf]
  %v43 = vld [vmem:[%s0 + $0x40] sm:$0xf]
  %v44 = vld [vmem:[%s0 + $0x44] sm:$0xf]
  %v45 = vld [vmem:[%s0 + $0x48] sm:$0xf]
  %v46 = vld [vmem:[%s0 + $0x4c] sm:$0xf]
  %v47 = vld [vmem:[%s0 + $0x50] sm:$0xf]
  %v48 = vld [vmem:[%s0 + $0x54] sm:$0xf]
  %v49 = vld [vmem:[%s0 + $0x58] sm:$0xf]
  %v50 = vld [vmem:[%s0 + $0x5c] sm:$0xf]
  %v51 = vld [vmem:[%s0 + $0x60] sm:$0xf]
  %v52 = vld [vmem:[%s0 + $0x64] sm:$0xf]
  %v53 = vld [vmem:[%s0 + $0x68] sm:$0xf]
  %v54 = vld [vmem:[%s0 + $0x6c] sm:$0xf]
  %v55 = vld [vmem:[%s0 + $0x70] sm:$0xf]
  %v56 = vld [vmem:[%s0 + $0x74] sm:$0xf]
  %v57 = vld [vmem:[%s0 + $0x78] sm:$0xf]
  %v58 = vld [vmem:[%s0 + $0x7c] sm:$0xf]
  %v59 = vld [vmem:[%s0 + $0x80] sm:$0xf]
  %v60 = vld [vmem:[%s0 + $0x84] sm:$0xf]
  %v61 = vld [vmem:[%s0 + $0x88] sm:$0xf]
  %v62 = vld [vmem:[%s0 + $0x8c] sm:$0xf]
  %v63 = vld [vmem:[%s0 + $0x90] sm:$0xf]
  %v64 = vld [vmem:[%s0 + $0x94] sm:$0xf]
  %v65 = vld [vmem:[%s0 + $0x98] sm:$0xf]
  %v66 = vld [vmem:[%s0 + $0x9c] sm:$0xf]
  %v67 = vld [vmem:[%s0 + $0xa0] sm:$0xf]
  %v68 = vld [vmem:[%s0 + $0xa4] sm:$0xf]
  %v69 = vld [vmem:[%s0 + $0xa8] sm:$0xf]
  %v70 = vld [vmem:[%s0 + $0xac] sm:$0xf]
  %v71 = vld [vmem:[%s0 + $0xb0] sm:$0xf]
  %v72 = vld [vmem:[%s0 + $0xb4] sm:$0xf]
  %v73 = vld [vmem:[%s0 + $0xb8] sm:$0xf]
  %v74 = vld [vmem:[%s0 + $0xbc] sm:$0xf]
  %v75 = vld [vmem:[%s0 + $0xc0] sm:$0xf]
  %v76 = vld [vmem:[%s0 + $0xc4] sm:$0xf]
  %v77 = vld [vmem:[%s0 + $0xc8] sm:$0xf]
  %v78 = vld [vmem:[%s0 + $0xcc] sm:$0xf]
  %v79 = vld [vmem:[%s0 + $0xd0] sm:$0xf]
  %v80 = vld [vmem:[%s0 + $0xd4] sm:$0xf]
  %v81 = vld [vmem:[%s0 + $0xd8] sm:$0xf]
  %v82 = vld [vmem:[%s0 + $0xdc] sm:$0xf]
  %v83 = vld [vmem:[%s0 + $0xe0] sm:$0xf]
  %v84 = vld [vmem:[%s0 + $0xe4] sm:$0xf]
  %v85 = vld [vmem:[%s0 + $0xe8] sm:$0xf]
  %v86 = vld [vmem:[%s0 + $0xec] sm:$0xf]
  %v87 = vld [vmem:[%s0 + $0xf0] sm:$0xf]
  %v88 = vld [vmem:[%s0 + $0xf4] sm:$0xf]
  %v89 = vld [vmem:[%s0 + $0xf8] sm:$0xf]
  %v90 = vld [vmem:[%s0 + $0xfc] sm:$0xf]
  %v91 = vld [vmem:[%s3] sm:$0xf]
  %v92 = vld [vmem:[%s3 + $0x4] sm:$0xf]
  %v93 = vld [vmem:[%s3 + $0x8] sm:$0xf]
  %v94 = vld [vmem:[%s3 + $0xc] sm:$0xf]
  %v95 = vld [vmem:[%s3 + $0x10] sm:$0xf]
  %v96 = vld [vmem:[%s3 + $0x14] sm:$0xf]
  %v97 = vld [vmem:[%s3 + $0x18] sm:$0xf]
  %v98 = vld [vmem:[%s3 + $0x1c] sm:$0xf]
  %v99 = vld [vmem:[%s6] sm:$0x1]
  %v100 = vperm.slane %v99, 0
  %v165 = vunpack.c.l.b16 %v27
  %v166 = vunpack.c.l.b16 %v28
  %v167 = vunpack.c.l.b16 %v29
  %v168 = vunpack.c.l.b16 %v30
  %v169 = vunpack.c.l.b16 %v31
  %v170 = vunpack.c.l.b16 %v32
  %v171 = vunpack.c.l.b16 %v33
  %v172 = vunpack.c.l.b16 %v34
  %v173 = vunpack.c.l.b16 %v35
  %v174 = vunpack.c.l.b16 %v36
  %v175 = vunpack.c.l.b16 %v37
  %v176 = vunpack.c.l.b16 %v38
  %v177 = vunpack.c.l.b16 %v39
  %v178 = vunpack.c.l.b16 %v40
  %v179 = vunpack.c.l.b16 %v41
  %v180 = vunpack.c.l.b16 %v42
  %v181 = vunpack.c.l.b16 %v43
  %v182 = vunpack.c.l.b16 %v44
  %v183 = vunpack.c.l.b16 %v45
  %v184 = vunpack.c.l.b16 %v46
  %v185 = vunpack.c.l.b16 %v47
  %v186 = vunpack.c.l.b16 %v48
  %v187 = vunpack.c.l.b16 %v49
  %v188 = vunpack.c.l.b16 %v50
  %v189 = vunpack.c.l.b16 %v51
  %v190 = vunpack.c.l.b16 %v52
  %v191 = vunpack.c.l.b16 %v53
  %v192 = vunpack.c.l.b16 %v54
  %v193 = vunpack.c.l.b16 %v55
  %v194 = vunpack.c.l.b16 %v56
  %v195 = vunpack.c.l.b16 %v57
  %v196 = vunpack.c.l.b16 %v58
  %v197 = vunpack.c.l.b16 %v59
  %v198 = vunpack.c.l.b16 %v60
  %v199 = vunpack.c.l.b16 %v61
  %v200 = vunpack.c.l.b16 %v62
  %v201 = vunpack.c.l.b16 %v63
  %v202 = vunpack.c.l.b16 %v64
  %v203 = vunpack.c.l.b16 %v65
  %v204 = vunpack.c.l.b16 %v66
  %v205 = vunpack.c.l.b16 %v67
  %v206 = vunpack.c.l.b16 %v68
  %v207 = vunpack.c.l.b16 %v69
  %v208 = vunpack.c.l.b16 %v70
  %v209 = vunpack.c.l.b16 %v71
  %v210 = vunpack.c.l.b16 %v72
  %v211 = vunpack.c.l.b16 %v73
  %v212 = vunpack.c.l.b16 %v74
  %v213 = vunpack.c.l.b16 %v75
  %v214 = vunpack.c.l.b16 %v76
  %v215 = vunpack.c.l.b16 %v77
  %v216 = vunpack.c.l.b16 %v78
  %v217 = vunpack.c.l.b16 %v79
  %v218 = vunpack.c.l.b16 %v80
  %v219 = vunpack.c.l.b16 %v81
  %v220 = vunpack.c.l.b16 %v82
  %v221 = vunpack.c.l.b16 %v83
  %v222 = vunpack.c.l.b16 %v84
  %v223 = vunpack.c.l.b16 %v85
  %v224 = vunpack.c.l.b16 %v86
  %v225 = vunpack.c.l.b16 %v87
  %v226 = vunpack.c.l.b16 %v88
  %v227 = vunpack.c.l.b16 %v89
  %v228 = vunpack.c.l.b16 %v90
  %v229 = vpack.c.b16 %v166, %v165
  %v230 = vpack.c.b16 %v168, %v167
  %v231 = vpack.c.b16 %v170, %v169
  %v232 = vpack.c.b16 %v172, %v171
  %v233 = vpack.c.b16 %v174, %v173
  %v234 = vpack.c.b16 %v176, %v175
  %v235 = vpack.c.b16 %v178, %v177
  %v236 = vpack.c.b16 %v180, %v179
  %v237 = vpack.c.b16 %v182, %v181
  %v238 = vpack.c.b16 %v184, %v183
  %v239 = vpack.c.b16 %v186, %v185
  %v240 = vpack.c.b16 %v188, %v187
  %v241 = vpack.c.b16 %v190, %v189
  %v242 = vpack.c.b16 %v192, %v191
  %v243 = vpack.c.b16 %v194, %v193
  %v244 = vpack.c.b16 %v196, %v195
  %v245 = vpack.c.b16 %v198, %v197
  %v246 = vpack.c.b16 %v200, %v199
  %v247 = vpack.c.b16 %v202, %v201
  %v248 = vpack.c.b16 %v204, %v203
  %v249 = vpack.c.b16 %v206, %v205
  %v250 = vpack.c.b16 %v208, %v207
  %v251 = vpack.c.b16 %v210, %v209
  %v252 = vpack.c.b16 %v212, %v211
  %v253 = vpack.c.b16 %v214, %v213
  %v254 = vpack.c.b16 %v216, %v215
  %v255 = vpack.c.b16 %v218, %v217
  %v256 = vpack.c.b16 %v220, %v219
  %v257 = vpack.c.b16 %v222, %v221
  %v258 = vpack.c.b16 %v224, %v223
  %v259 = vpack.c.b16 %v226, %v225
  %v260 = vpack.c.b16 %v228, %v227
  %v269 = vunpack.c.l.b16 %v91
  %v270 = vunpack.c.l.b16 %v92
  %v271 = vunpack.c.l.b16 %v93
  %v272 = vunpack.c.l.b16 %v94
  %v273 = vunpack.c.l.b16 %v95
  %v274 = vunpack.c.l.b16 %v96
  %v275 = vunpack.c.l.b16 %v97
  %v276 = vunpack.c.l.b16 %v98
  %v277 = vpack.c.b16 %v270, %v269
  %v278 = vpack.c.b16 %v272, %v271
  %v279 = vpack.c.b16 %v274, %v273
  %v280 = vpack.c.b16 %v276, %v275
  %vm285 = vcmask 523264
  %v287 = vsel %vm285, %v229, 0
  %v290 = vsel %vm285, %v230, 0
  %v293 = vsel %vm285, %v231, 0
  %v296 = vsel %vm285, %v232, 0
  %v299 = vsel %vm285, %v233, 0
  %v302 = vsel %vm285, %v234, 0
  %v305 = vsel %vm285, %v235, 0
  %v308 = vsel %vm285, %v236, 0
  %v311 = vsel %vm285, %v237, 0
  %v314 = vsel %vm285, %v238, 0
  %v317 = vsel %vm285, %v239, 0
  %v320 = vsel %vm285, %v240, 0
  %v323 = vsel %vm285, %v241, 0
  %v326 = vsel %vm285, %v242, 0
  %v329 = vsel %vm285, %v243, 0
  %v332 = vsel %vm285, %v244, 0
  %v335 = vsel %vm285, %v245, 0
  %v338 = vsel %vm285, %v246, 0
  %v341 = vsel %vm285, %v247, 0
  %v344 = vsel %vm285, %v248, 0
  %v347 = vsel %vm285, %v249, 0
  %v350 = vsel %vm285, %v250, 0
  %v353 = vsel %vm285, %v251, 0
  %v356 = vsel %vm285, %v252, 0
  %v359 = vsel %vm285, %v253, 0
  %v362 = vsel %vm285, %v254, 0
  %v365 = vsel %vm285, %v255, 0
  %v368 = vsel %vm285, %v256, 0
  %v371 = vsel %vm285, %v257, 0
  %v374 = vsel %vm285, %v258, 0
  %v377 = vsel %vm285, %v259, 0
  %v380 = vsel %vm285, %v260, 0
  %382 = vmatpush.bf16.msra.mxu0 0
  %383 = vmatpush.bf16.msra.mxu0 0
  %384 = vmatpush.bf16.msra.mxu0 0
  %385 = vmatpush.bf16.msra.mxu0 0
  %386 = vmatpush.bf16.msra.mxu0 %v280
  %387 = vmatpush.bf16.msra.mxu0 %v279
  %388 = vmatpush.bf16.msra.mxu0 %v278
  %389 = vmatpush.bf16.msra.mxu0 %v277
  %390 = vmatmul.bf16.gmra.mxu0 %v287
  %v391 = vpop.f32.mrf.mxu0
  %v392 = vadd.f32 %v100, %v391
  %v393 = vpop.f32.mrf.mxu0
  %v394 = vadd.f32 %v100, %v393
  %395 = vmatmul.bf16.gmra.mxu0 %v290
  %v396 = vpop.f32.mrf.mxu0
  %v397 = vadd.f32 %v100, %v396
  %v398 = vpop.f32.mrf.mxu0
  %v399 = vadd.f32 %v100, %v398
  %400 = vmatmul.bf16.gmra.mxu0 %v293
  %v401 = vpop.f32.mrf.mxu0
  %v402 = vadd.f32 %v100, %v401
  %v403 = vpop.f32.mrf.mxu0
  %v404 = vadd.f32 %v100, %v403
  %405 = vmatmul.bf16.gmra.mxu0 %v296
  %v406 = vpop.f32.mrf.mxu0
  %v407 = vadd.f32 %v100, %v406
  %v408 = vpop.f32.mrf.mxu0
  %v409 = vadd.f32 %v100, %v408
  %410 = vmatmul.bf16.gmra.mxu0 %v299
  %v411 = vpop.f32.mrf.mxu0
  %v412 = vadd.f32 %v100, %v411
  %v413 = vpop.f32.mrf.mxu0
  %v414 = vadd.f32 %v100, %v413
  %415 = vmatmul.bf16.gmra.mxu0 %v302
  %v416 = vpop.f32.mrf.mxu0
  %v417 = vadd.f32 %v100, %v416
  %v418 = vpop.f32.mrf.mxu0
  %v419 = vadd.f32 %v100, %v418
  %420 = vmatmul.bf16.gmra.mxu0 %v305
  %v421 = vpop.f32.mrf.mxu0
  %v422 = vadd.f32 %v100, %v421
  %v423 = vpop.f32.mrf.mxu0
  %v424 = vadd.f32 %v100, %v423
  %425 = vmatmul.bf16.gmra.mxu0 %v308
  %v426 = vpop.f32.mrf.mxu0
  %v427 = vadd.f32 %v100, %v426
  %v428 = vpop.f32.mrf.mxu0
  %v429 = vadd.f32 %v100, %v428
  %430 = vmatmul.bf16.gmra.mxu0 %v311
  %v431 = vpop.f32.mrf.mxu0
  %v432 = vadd.f32 %v100, %v431
  %v433 = vpop.f32.mrf.mxu0
  %v434 = vadd.f32 %v100, %v433
  %435 = vmatmul.bf16.gmra.mxu0 %v314
  %v436 = vpop.f32.mrf.mxu0
  %v437 = vadd.f32 %v100, %v436
  %v438 = vpop.f32.mrf.mxu0
  %v439 = vadd.f32 %v100, %v438
  %440 = vmatmul.bf16.gmra.mxu0 %v317
  %v441 = vpop.f32.mrf.mxu0
  %v442 = vadd.f32 %v100, %v441
  %v443 = vpop.f32.mrf.mxu0
  %v444 = vadd.f32 %v100, %v443
  %445 = vmatmul.bf16.gmra.mxu0 %v320
  %v446 = vpop.f32.mrf.mxu0
  %v447 = vadd.f32 %v100, %v446
  %v448 = vpop.f32.mrf.mxu0
  %v449 = vadd.f32 %v100, %v448
  %450 = vmatmul.bf16.gmra.mxu0 %v323
  %v451 = vpop.f32.mrf.mxu0
  %v452 = vadd.f32 %v100, %v451
  %v453 = vpop.f32.mrf.mxu0
  %v454 = vadd.f32 %v100, %v453
  %455 = vmatmul.bf16.gmra.mxu0 %v326
  %v456 = vpop.f32.mrf.mxu0
  %v457 = vadd.f32 %v100, %v456
  %v458 = vpop.f32.mrf.mxu0
  %v459 = vadd.f32 %v100, %v458
  %460 = vmatmul.bf16.gmra.mxu0 %v329
  %v461 = vpop.f32.mrf.mxu0
  %v462 = vadd.f32 %v100, %v461
  %v463 = vpop.f32.mrf.mxu0
  %v464 = vadd.f32 %v100, %v463
  %465 = vmatmul.bf16.gmra.mxu0 %v332
  %v466 = vpop.f32.mrf.mxu0
  %v467 = vadd.f32 %v100, %v466
  %v468 = vpop.f32.mrf.mxu0
  %v469 = vadd.f32 %v100, %v468
  %470 = vmatmul.bf16.gmra.mxu0 %v335
  %v471 = vpop.f32.mrf.mxu0
  %v472 = vadd.f32 %v100, %v471
  %v473 = vpop.f32.mrf.mxu0
  %v474 = vadd.f32 %v100, %v473
  %475 = vmatmul.bf16.gmra.mxu0 %v338
  %v476 = vpop.f32.mrf.mxu0
  %v477 = vadd.f32 %v100, %v476
  %v478 = vpop.f32.mrf.mxu0
  %v479 = vadd.f32 %v100, %v478
  %480 = vmatmul.bf16.gmra.mxu0 %v341
  %v481 = vpop.f32.mrf.mxu0
  %v482 = vadd.f32 %v100, %v481
  %v483 = vpop.f32.mrf.mxu0
  %v484 = vadd.f32 %v100, %v483
  %485 = vmatmul.bf16.gmra.mxu0 %v344
  %v486 = vpop.f32.mrf.mxu0
  %v487 = vadd.f32 %v100, %v486
  %v488 = vpop.f32.mrf.mxu0
  %v489 = vadd.f32 %v100, %v488
  %490 = vmatmul.bf16.gmra.mxu0 %v347
  %v491 = vpop.f32.mrf.mxu0
  %v492 = vadd.f32 %v100, %v491
  %v493 = vpop.f32.mrf.mxu0
  %v494 = vadd.f32 %v100, %v493
  %495 = vmatmul.bf16.gmra.mxu0 %v350
  %v496 = vpop.f32.mrf.mxu0
  %v497 = vadd.f32 %v100, %v496
  %v498 = vpop.f32.mrf.mxu0
  %v499 = vadd.f32 %v100, %v498
  %500 = vmatmul.bf16.gmra.mxu0 %v353
  %v501 = vpop.f32.mrf.mxu0
  %v502 = vadd.f32 %v100, %v501
  %v503 = vpop.f32.mrf.mxu0
  %v504 = vadd.f32 %v100, %v503
  %505 = vmatmul.bf16.gmra.mxu0 %v356
  %v506 = vpop.f32.mrf.mxu0
  %v507 = vadd.f32 %v100, %v506
  %v508 = vpop.f32.mrf.mxu0
  %v509 = vadd.f32 %v100, %v508
  %510 = vmatmul.bf16.gmra.mxu0 %v359
  %v511 = vpop.f32.mrf.mxu0
  %v512 = vadd.f32 %v100, %v511
  %v513 = vpop.f32.mrf.mxu0
  %v514 = vadd.f32 %v100, %v513
  %515 = vmatmul.bf16.gmra.mxu0 %v362
  %v516 = vpop.f32.mrf.mxu0
  %v517 = vadd.f32 %v100, %v516
  %v518 = vpop.f32.mrf.mxu0
  %v519 = vadd.f32 %v100, %v518
  %520 = vmatmul.bf16.gmra.mxu0 %v365
  %v521 = vpop.f32.mrf.mxu0
  %v522 = vadd.f32 %v100, %v521
  %v523 = vpop.f32.mrf.mxu0
  %v524 = vadd.f32 %v100, %v523
  %525 = vmatmul.bf16.gmra.mxu0 %v368
  %v526 = vpop.f32.mrf.mxu0
  %v527 = vadd.f32 %v100, %v526
  %v528 = vpop.f32.mrf.mxu0
  %v529 = vadd.f32 %v100, %v528
  %530 = vmatmul.bf16.gmra.mxu0 %v371
  %v531 = vpop.f32.mrf.mxu0
  %v532 = vadd.f32 %v100, %v531
  %v533 = vpop.f32.mrf.mxu0
  %v534 = vadd.f32 %v100, %v533
  %535 = vmatmul.bf16.gmra.mxu0 %v374
  %v536 = vpop.f32.mrf.mxu0
  %v537 = vadd.f32 %v100, %v536
  %v538 = vpop.f32.mrf.mxu0
  %v539 = vadd.f32 %v100, %v538
  %540 = vmatmul.bf16.gmra.mxu0 %v377
  %v541 = vpop.f32.mrf.mxu0
  %v542 = vadd.f32 %v100, %v541
  %v543 = vpop.f32.mrf.mxu0
  %v544 = vadd.f32 %v100, %v543
  %545 = vmatmul.bf16.gmra.mxu0 %v380
  %v546 = vpop.f32.mrf.mxu0
  %v547 = vadd.f32 %v100, %v546
  %v548 = vpop.f32.mrf.mxu0
  %v549 = vadd.f32 %v100, %v548
  %550 = vdwg.mxu0
  %v551 = vmax.f32 %v392, 0.0
  %v552 = vmax.f32 %v394, 0.0
  %v553 = vmax.f32 %v397, 0.0
  %v554 = vmax.f32 %v399, 0.0
  %v555 = vmax.f32 %v402, 0.0
  %v556 = vmax.f32 %v404, 0.0
  %v557 = vmax.f32 %v407, 0.0
  %v558 = vmax.f32 %v409, 0.0
  %v559 = vmax.f32 %v412, 0.0
  %v560 = vmax.f32 %v414, 0.0
  %v561 = vmax.f32 %v417, 0.0
  %v562 = vmax.f32 %v419, 0.0
  %v563 = vmax.f32 %v422, 0.0
  %v564 = vmax.f32 %v424, 0.0
  %v565 = vmax.f32 %v427, 0.0
  %v566 = vmax.f32 %v429, 0.0
  %v567 = vmax.f32 %v432, 0.0
  %v568 = vmax.f32 %v434, 0.0
  %v569 = vmax.f32 %v437, 0.0
  %v570 = vmax.f32 %v439, 0.0
  %v571 = vmax.f32 %v442, 0.0
  %v572 = vmax.f32 %v444, 0.0
  %v573 = vmax.f32 %v447, 0.0
  %v574 = vmax.f32 %v449, 0.0
  %v575 = vmax.f32 %v452, 0.0
  %v576 = vmax.f32 %v454, 0.0
  %v577 = vmax.f32 %v457, 0.0
  %v578 = vmax.f32 %v459, 0.0
  %v579 = vmax.f32 %v462, 0.0
  %v580 = vmax.f32 %v464, 0.0
  %v581 = vmax.f32 %v467, 0.0
  %v582 = vmax.f32 %v469, 0.0
  %v583 = vmax.f32 %v472, 0.0
  %v584 = vmax.f32 %v474, 0.0
  %v585 = vmax.f32 %v477, 0.0
  %v586 = vmax.f32 %v479, 0.0
  %v587 = vmax.f32 %v482, 0.0
  %v588 = vmax.f32 %v484, 0.0
  %v589 = vmax.f32 %v487, 0.0
  %v590 = vmax.f32 %v489, 0.0
  %v591 = vmax.f32 %v492, 0.0
  %v592 = vmax.f32 %v494, 0.0
  %v593 = vmax.f32 %v497, 0.0
  %v594 = vmax.f32 %v499, 0.0
  %v595 = vmax.f32 %v502, 0.0
  %v596 = vmax.f32 %v504, 0.0
  %v597 = vmax.f32 %v507, 0.0
  %v598 = vmax.f32 %v509, 0.0
  %v599 = vmax.f32 %v512, 0.0
  %v600 = vmax.f32 %v514, 0.0
  %v601 = vmax.f32 %v517, 0.0
  %v602 = vmax.f32 %v519, 0.0
  %v603 = vmax.f32 %v522, 0.0
  %v604 = vmax.f32 %v524, 0.0
  %v605 = vmax.f32 %v527, 0.0
  %v606 = vmax.f32 %v529, 0.0
  %v607 = vmax.f32 %v532, 0.0
  %v608 = vmax.f32 %v534, 0.0
  %v609 = vmax.f32 %v537, 0.0
  %v610 = vmax.f32 %v539, 0.0
  %v611 = vmax.f32 %v542, 0.0
  %v612 = vmax.f32 %v544, 0.0
  %v613 = vmax.f32 %v547, 0.0
  %v614 = vmax.f32 %v549, 0.0
  %v615 = vld [vmem:[%s2] sm:$0xff]
  %v616 = vld [vmem:[%s2 + $0x8] sm:$0xff]
  %v617 = vld [vmem:[%s2 + $0x10] sm:$0xff]
  %v618 = vld [vmem:[%s2 + $0x18] sm:$0xff]
  %619 = vmatpush.msra.mxu0 %v566
  %620 = vmatpush.msra.mxu0 %v565
  %621 = vmatpush.msra.mxu0 %v564
  %622 = vmatpush.msra.mxu0 %v563
  %623 = vmatpush.msra.mxu0 %v562
  %624 = vmatpush.msra.mxu0 %v561
  %625 = vmatpush.msra.mxu0 %v560
  %626 = vmatpush.msra.mxu0 %v559
  %627 = vmatpush.msra.mxu0 %v558
  %628 = vmatpush.msra.mxu0 %v557
  %629 = vmatpush.msra.mxu0 %v556
  %630 = vmatpush.msra.mxu0 %v555
  %631 = vmatpush.msra.mxu0 %v554
  %632 = vmatpush.msra.mxu0 %v553
  %633 = vmatpush.msra.mxu0 %v552
  %634 = vmatpush.msra.mxu0 %v551
  %635 = vmatmul.f32.gmra.mxu0 %v615
  %v636 = vpop.f32.mrf.mxu0
  %v637 = vadd.f32 0.0, %v636
  %638 = vdwg.mxu0
  %639 = vmatpush.msra.mxu0 %v582
  %640 = vmatpush.msra.mxu0 %v581
  %641 = vmatpush.msra.mxu0 %v580
  %642 = vmatpush.msra.mxu0 %v579
  %643 = vmatpush.msra.mxu0 %v578
  %644 = vmatpush.msra.mxu0 %v577
  %645 = vmatpush.msra.mxu0 %v576
  %646 = vmatpush.msra.mxu0 %v575
  %647 = vmatpush.msra.mxu0 %v574
  %648 = vmatpush.msra.mxu0 %v573
  %649 = vmatpush.msra.mxu0 %v572
  %650 = vmatpush.msra.mxu0 %v571
  %651 = vmatpush.msra.mxu0 %v570
  %652 = vmatpush.msra.mxu0 %v569
  %653 = vmatpush.msra.mxu0 %v568
  %654 = vmatpush.msra.mxu0 %v567
  %655 = vmatmul.f32.gmra.mxu0 %v616
  %v656 = vpop.f32.mrf.mxu0
  %v657 = vadd.f32 %v637, %v656
  %658 = vdwg.mxu0
  %659 = vmatpush.msra.mxu0 %v598
  %660 = vmatpush.msra.mxu0 %v597
  %661 = vmatpush.msra.mxu0 %v596
  %662 = vmatpush.msra.mxu0 %v595
  %663 = vmatpush.msra.mxu0 %v594
  %664 = vmatpush.msra.mxu0 %v593
  %665 = vmatpush.msra.mxu0 %v592
  %666 = vmatpush.msra.mxu0 %v591
  %667 = vmatpush.msra.mxu0 %v590
  %668 = vmatpush.msra.mxu0 %v589
  %669 = vmatpush.msra.mxu0 %v588
  %670 = vmatpush.msra.mxu0 %v587
  %671 = vmatpush.msra.mxu0 %v586
  %672 = vmatpush.msra.mxu0 %v585
  %673 = vmatpush.msra.mxu0 %v584
  %674 = vmatpush.msra.mxu0 %v583
  %675 = vmatmul.f32.gmra.mxu0 %v617
  %v676 = vpop.f32.mrf.mxu0
  %v677 = vadd.f32 %v657, %v676
  %678 = vdwg.mxu0
  %679 = vmatpush.msra.mxu0 %v614
  %680 = vmatpush.msra.mxu0 %v613
  %681 = vmatpush.msra.mxu0 %v612
  %682 = vmatpush.msra.mxu0 %v611
  %683 = vmatpush.msra.mxu0 %v610
  %684 = vmatpush.msra.mxu0 %v609
  %685 = vmatpush.msra.mxu0 %v608
  %686 = vmatpush.msra.mxu0 %v607
  %687 = vmatpush.msra.mxu0 %v606
  %688 = vmatpush.msra.mxu0 %v605
  %689 = vmatpush.msra.mxu0 %v604
  %690 = vmatpush.msra.mxu0 %v603
  %691 = vmatpush.msra.mxu0 %v602
  %692 = vmatpush.msra.mxu0 %v601
  %693 = vmatpush.msra.mxu0 %v600
  %694 = vmatpush.msra.mxu0 %v599
  %695 = vmatmul.f32.gmra.mxu0 %v618
  %v696 = vpop.f32.mrf.mxu0
  %v697 = vadd.f32 %v677, %v696
  %698 = vdwg.mxu0
  %v700 = vrot.slane %v697, 2
  %701 = vrot.lane.b32.xlu0 %v700, 32
  %v702 = vpop.permute.xlu0 %701
  %v704 = vrot.slane %v697, 4
  %705 = vrot.lane.b32.xlu0 %v704, 64
  %v706 = vpop.permute.xlu0 %705
  %v708 = vrot.slane %v697, 6
  %709 = vrot.lane.b32.xlu0 %v708, 96
  %v710 = vpop.permute.xlu0 %709
  %vm712 = vcmask 261120
  %v713 = vsel %vm712, %v697, %v702
  %v714 = vsel %vm285, %v713, %v706
  %vm715 = vcmask 785408
  %v716 = vsel %vm715, %v714, %v710
  %v717 = vld [vmem:[%s3] sm:$0xf]
  %v718 = vld [vmem:[%s3 + $0x4] sm:$0xf]
  %v719 = vld [vmem:[%s3 + $0x8] sm:$0xf]
  %v720 = vld [vmem:[%s3 + $0xc] sm:$0xf]
  %v721 = vld [vmem:[%s3 + $0x10] sm:$0xf]
  %v722 = vld [vmem:[%s3 + $0x14] sm:$0xf]
  %v723 = vld [vmem:[%s3 + $0x18] sm:$0xf]
  %v724 = vld [vmem:[%s3 + $0x1c] sm:$0xf]
  %v725 = vld [vmem:[%s3 + $0x20] sm:$0xf]
  %v726 = vld [vmem:[%s3 + $0x24] sm:$0xf]
  %v727 = vld [vmem:[%s3 + $0x28] sm:$0xf]
  %v728 = vld [vmem:[%s3 + $0x2c] sm:$0xf]
  %v729 = vld [vmem:[%s3 + $0x30] sm:$0xf]
  %v730 = vld [vmem:[%s3 + $0x34] sm:$0xf]
  %v731 = vld [vmem:[%s3 + $0x38] sm:$0xf]
  %v732 = vld [vmem:[%s3 + $0x3c] sm:$0xf]
  %v733 = vpack.c.bf16 %v716, %v716
  %v734 = vld [vmem:[%s6 + $0x1] sm:$0x1]
  %v735 = vperm.slane %v734, 0
  %v752 = vunpack.c.l.b16 %v717
  %v753 = vunpack.c.l.b16 %v718
  %v754 = vunpack.c.l.b16 %v719
  %v755 = vunpack.c.l.b16 %v720
  %v756 = vunpack.c.l.b16 %v721
  %v757 = vunpack.c.l.b16 %v722
  %v758 = vunpack.c.l.b16 %v723
  %v759 = vunpack.c.l.b16 %v724
  %v760 = vunpack.c.l.b16 %v725
  %v761 = vunpack.c.l.b16 %v726
  %v762 = vunpack.c.l.b16 %v727
  %v763 = vunpack.c.l.b16 %v728
  %v764 = vunpack.c.l.b16 %v729
  %v765 = vunpack.c.l.b16 %v730
  %v766 = vunpack.c.l.b16 %v731
  %v767 = vunpack.c.l.b16 %v732
  %v768 = vpack.c.b16 %v753, %v752
  %v769 = vpack.c.b16 %v755, %v754
  %v770 = vpack.c.b16 %v757, %v756
  %v771 = vpack.c.b16 %v759, %v758
  %v772 = vpack.c.b16 %v761, %v760
  %v773 = vpack.c.b16 %v763, %v762
  %v774 = vpack.c.b16 %v765, %v764
  %v775 = vpack.c.b16 %v767, %v766
  %776 = vrot.lane.b32.xlu0 %v768, 96
  %v777 = vpop.permute.xlu0 %776
  %778 = vrot.lane.b32.xlu0 %v769, 96
  %v779 = vpop.permute.xlu0 %778
  %780 = vrot.lane.b32.xlu0 %v770, 96
  %v781 = vpop.permute.xlu0 %780
  %782 = vrot.lane.b32.xlu0 %v771, 96
  %v783 = vpop.permute.xlu0 %782
  %784 = vrot.lane.b32.xlu0 %v772, 96
  %v785 = vpop.permute.xlu0 %784
  %786 = vrot.lane.b32.xlu0 %v773, 96
  %v787 = vpop.permute.xlu0 %786
  %788 = vrot.lane.b32.xlu0 %v774, 96
  %v789 = vpop.permute.xlu0 %788
  %790 = vrot.lane.b32.xlu0 %v775, 96
  %v791 = vpop.permute.xlu0 %790
  %800 = vmatpush.bf16.msra.mxu0 %v791
  %801 = vmatpush.bf16.msra.mxu0 %v789
  %802 = vmatpush.bf16.msra.mxu0 %v787
  %803 = vmatpush.bf16.msra.mxu0 %v785
  %804 = vmatpush.bf16.msra.mxu0 %v783
  %805 = vmatpush.bf16.msra.mxu0 %v781
  %806 = vmatpush.bf16.msra.mxu0 %v779
  %807 = vmatpush.bf16.msra.mxu0 %v777
  %808 = vmatmul.bf16.gmra.mxu0 %v733
  %v809 = vpop.f32.mrf.mxu0
  %v810 = vadd.f32 %v735, %v809
  %v811 = vpop.f32.mrf.mxu0
  %812 = vdwg.mxu0
  %v813 = vmul.f32 %v810, %v810
  %vm814 = vcmask 254976
  %v815 = vsel %vm814, %v813, 0.0
  %816 = vadd.xlane.f32.xlu0 %v815
  %v817 = vpop.xlane.xlu0 %816
  %v818 = vmax.f32 %v817, 1e-24
  %v819 = vrsqrt.pop %v818
  %v820 = vmul.f32 %v819, %v818
  %v821 = vmul.f32 %v820, %v819
  %v822 = vmul.f32 0.5, %v821
  %v823 = vsub.f32 1.5, %v822
  %v824 = vmul.f32 %v819, %v823
  %vm825 = vweird.f32 %v818
  %vm826 = vweird.f32 %v819
  %vm827 = vmor %vm825, %vm826
  %v828 = vsel %vm827, %v819, %v824
  %v829 = vmul.f32 %v810, %v828
  %v830 = vld [vmem:[%s1] sm:$0x3]
  %v831 = vlaneseq
  %v832 = vand.u32 %v831, 127
  %833 = vset.pattern.permute.xlu0 0
  %834 = vperm.xlu0 %833, %v830
  %v835 = vpop.permute.xlu0 %834
  %vm836 = vcmp.eq.s32.totalorder %v832, %v835
  %v837 = vsel %vm836, 1, 0
  %v838 = vcvt.s32.f32 %v837
  %839 = vset.pattern.permute.xlu0 1
  %840 = vperm.xlu0 %839, %v830
  %v841 = vpop.permute.xlu0 %840
  %vm842 = vcmp.eq.s32.totalorder %v832, %v841
  %v843 = vsel %vm842, 1, 0
  %v844 = vcvt.s32.f32 %v843
  %846 = vrot.lane.b32.xlu0 %v838, 32
  %v847 = vpop.permute.xlu0 %846
  %850 = vrot.lane.b32.xlu0 %v844, 42
  %v851 = vpop.permute.xlu0 %850
  %v853 = vsel %vm712, %v829, %v847
  %vm854 = vcmask 343040
  %v855 = vsel %vm854, %v853, %v851
  %vm856 = vcmask 424960
  %v857 = vsel %vm856, %v855, 0.0
  %v858 = vld [vmem:[%s4] sm:$0xff]
  %v859 = vld [vmem:[%s4 + $0x8] sm:$0xf]
  %v860 = vld [vmem:[%s4 + $0xc] sm:$0xff]
  %v861 = vld [vmem:[%s4 + $0x14] sm:$0xf]
  %v862 = vld [vmem:[%s4 + $0x18] sm:$0xff]
  %v863 = vld [vmem:[%s4 + $0x20] sm:$0xf]
  %v864 = vld [vmem:[%s4 + $0x24] sm:$0xff]
  %v865 = vld [vmem:[%s4 + $0x2c] sm:$0xf]
  %v866 = vld [vmem:[%s4 + $0x30] sm:$0xff]
  %v867 = vld [vmem:[%s4 + $0x38] sm:$0xf]
  %v868 = vld [vmem:[%s4 + $0x3c] sm:$0xff]
  %v869 = vld [vmem:[%s4 + $0x44] sm:$0xf]
  %v870 = vld [vmem:[%s4 + $0x48] sm:$0xff]
  %v871 = vld [vmem:[%s4 + $0x50] sm:$0xf]
  %v872 = vld [vmem:[%s4 + $0x54] sm:$0xff]
  %v873 = vld [vmem:[%s4 + $0x5c] sm:$0xf]
  %v874 = vpack.c.bf16 %v857, %v857
  %s875 = scalar_lea.vmem %s6, 2
  %v876 = vld [vmem:[%s875] ss:$4 sm:$0x7]
  %v878 = vperm.slane %v876, 0
  %v879 = vperm.slane %v876, 1
  %v880 = vperm.slane %v876, 2
  %v900 = vunpack.c.l.b16 %v858
  %v901 = vunpack.c.h.b16 %v858
  %v902 = vunpack.c.l.b16 %v859
  %v903 = vunpack.c.l.b16 %v860
  %v904 = vunpack.c.h.b16 %v860
  %v905 = vunpack.c.l.b16 %v861
  %v906 = vunpack.c.l.b16 %v862
  %v907 = vunpack.c.h.b16 %v862
  %v908 = vunpack.c.l.b16 %v863
  %v909 = vunpack.c.l.b16 %v864
  %v910 = vunpack.c.h.b16 %v864
  %v911 = vunpack.c.l.b16 %v865
  %v912 = vunpack.c.l.b16 %v866
  %v913 = vunpack.c.h.b16 %v866
  %v914 = vunpack.c.l.b16 %v867
  %v915 = vunpack.c.l.b16 %v868
  %v916 = vunpack.c.h.b16 %v868
  %v917 = vunpack.c.l.b16 %v869
  %v918 = vunpack.c.l.b16 %v870
  %v919 = vunpack.c.h.b16 %v870
  %v920 = vunpack.c.l.b16 %v871
  %v921 = vunpack.c.l.b16 %v872
  %v922 = vunpack.c.h.b16 %v872
  %v923 = vunpack.c.l.b16 %v873
  %v924 = vpack.c.b16 %v903, %v900
  %v925 = vpack.c.b16 %v904, %v901
  %v926 = vpack.c.b16 %v905, %v902
  %v927 = vpack.c.b16 %v909, %v906
  %v928 = vpack.c.b16 %v910, %v907
  %v929 = vpack.c.b16 %v911, %v908
  %v930 = vpack.c.b16 %v915, %v912
  %v931 = vpack.c.b16 %v916, %v913
  %v932 = vpack.c.b16 %v917, %v914
  %v933 = vpack.c.b16 %v921, %v918
  %v934 = vpack.c.b16 %v922, %v919
  %v935 = vpack.c.b16 %v923, %v920
  %v949 = vsel %vm285, %v874, 0
  %951 = vmatpush.bf16.msra.mxu0 0
  %952 = vmatpush.bf16.msra.mxu0 0
  %953 = vmatpush.bf16.msra.mxu0 0
  %954 = vmatpush.bf16.msra.mxu0 0
  %955 = vmatpush.bf16.msra.mxu0 %v933
  %956 = vmatpush.bf16.msra.mxu0 %v930
  %957 = vmatpush.bf16.msra.mxu0 %v927
  %958 = vmatpush.bf16.msra.mxu0 %v924
  %959 = vmatmul.bf16.gmra.mxu0 %v949
  %v960 = vpop.f32.mrf.mxu0
  %v961 = vadd.f32 %v878, %v960
  %v962 = vpop.f32.mrf.mxu0
  %963 = vdwg.mxu0
  %964 = vmatpush.bf16.msra.mxu0 0
  %965 = vmatpush.bf16.msra.mxu0 0
  %966 = vmatpush.bf16.msra.mxu0 0
  %967 = vmatpush.bf16.msra.mxu0 0
  %968 = vmatpush.bf16.msra.mxu0 %v934
  %969 = vmatpush.bf16.msra.mxu0 %v931
  %970 = vmatpush.bf16.msra.mxu0 %v928
  %971 = vmatpush.bf16.msra.mxu0 %v925
  %972 = vmatmul.bf16.gmra.mxu0 %v949
  %v973 = vpop.f32.mrf.mxu0
  %v974 = vadd.f32 %v879, %v973
  %v975 = vpop.f32.mrf.mxu0
  %976 = vdwg.mxu0
  %977 = vmatpush.bf16.msra.mxu0 0
  %978 = vmatpush.bf16.msra.mxu0 0
  %979 = vmatpush.bf16.msra.mxu0 0
  %980 = vmatpush.bf16.msra.mxu0 0
  %981 = vmatpush.bf16.msra.mxu0 %v935
  %982 = vmatpush.bf16.msra.mxu0 %v932
  %983 = vmatpush.bf16.msra.mxu0 %v929
  %984 = vmatpush.bf16.msra.mxu0 %v926
  %985 = vmatmul.bf16.gmra.mxu0 %v949
  %v986 = vpop.f32.mrf.mxu0
  %v987 = vadd.f32 %v880, %v986
  %v988 = vpop.f32.mrf.mxu0
  %989 = vdwg.mxu0
  %v990 = vmax.f32 %v961, 0.0
  %v991 = vmax.f32 %v974, 0.0
  %v992 = vmax.f32 %v987, 0.0
  %v993 = vld [vmem:[%s5] sm:$0xf]
  %v994 = vld [vmem:[%s5 + $0x4] sm:$0xf]
  %v995 = vld [vmem:[%s5 + $0x8] sm:$0xf]
  %v996 = vld [vmem:[%s5 + $0xc] sm:$0xf]
  %v997 = vld [vmem:[%s5 + $0x10] sm:$0xf]
  %v998 = vld [vmem:[%s5 + $0x14] sm:$0xf]
  %v999 = vld [vmem:[%s5 + $0x18] sm:$0xf]
  %v1000 = vld [vmem:[%s5 + $0x1c] sm:$0xf]
  %v1001 = vld [vmem:[%s5 + $0x20] sm:$0xf]
  %v1002 = vld [vmem:[%s5 + $0x24] sm:$0xf]
  %v1003 = vld [vmem:[%s5 + $0x28] sm:$0xf]
  %v1004 = vld [vmem:[%s5 + $0x2c] sm:$0xf]
  %v1005 = vld [vmem:[%s5 + $0x30] sm:$0xf]
  %v1006 = vld [vmem:[%s5 + $0x34] sm:$0xf]
  %v1007 = vld [vmem:[%s5 + $0x38] sm:$0xf]
  %v1008 = vld [vmem:[%s5 + $0x3c] sm:$0xf]
  %v1009 = vld [vmem:[%s5 + $0x40] sm:$0xf]
  %v1010 = vld [vmem:[%s5 + $0x44] sm:$0xf]
  %v1011 = vld [vmem:[%s5 + $0x48] sm:$0xf]
  %v1012 = vld [vmem:[%s5 + $0x4c] sm:$0xf]
  %v1013 = vld [vmem:[%s5 + $0x50] sm:$0xf]
  %v1014 = vld [vmem:[%s5 + $0x54] sm:$0xf]
  %v1015 = vld [vmem:[%s5 + $0x58] sm:$0xf]
  %v1016 = vld [vmem:[%s5 + $0x5c] sm:$0xf]
  %v1017 = vld [vmem:[%s5 + $0x60] sm:$0xf]
  %v1018 = vld [vmem:[%s5 + $0x64] sm:$0xf]
  %v1019 = vld [vmem:[%s5 + $0x68] sm:$0xf]
  %v1020 = vld [vmem:[%s5 + $0x6c] sm:$0xf]
  %v1021 = vld [vmem:[%s5 + $0x70] sm:$0xf]
  %v1022 = vld [vmem:[%s5 + $0x74] sm:$0xf]
  %v1023 = vld [vmem:[%s5 + $0x78] sm:$0xf]
  %v1024 = vld [vmem:[%s5 + $0x7c] sm:$0xf]
  %v1025 = vld [vmem:[%s5 + $0x80] sm:$0xf]
  %v1026 = vld [vmem:[%s5 + $0x84] sm:$0xf]
  %v1027 = vld [vmem:[%s5 + $0x88] sm:$0xf]
  %v1028 = vld [vmem:[%s5 + $0x8c] sm:$0xf]
  %v1029 = vld [vmem:[%s5 + $0x90] sm:$0xf]
  %v1030 = vld [vmem:[%s5 + $0x94] sm:$0xf]
  %v1031 = vld [vmem:[%s5 + $0x98] sm:$0xf]
  %v1032 = vld [vmem:[%s5 + $0x9c] sm:$0xf]
  %v1033 = vld [vmem:[%s5 + $0xa0] sm:$0xf]
  %v1034 = vld [vmem:[%s5 + $0xa4] sm:$0xf]
  %v1035 = vld [vmem:[%s5 + $0xa8] sm:$0xf]
  %v1036 = vld [vmem:[%s5 + $0xac] sm:$0xf]
  %v1037 = vld [vmem:[%s5 + $0xb0] sm:$0xf]
  %v1038 = vld [vmem:[%s5 + $0xb4] sm:$0xf]
  %v1039 = vld [vmem:[%s5 + $0xb8] sm:$0xf]
  %v1040 = vld [vmem:[%s5 + $0xbc] sm:$0xf]
  %v1041 = vpack.c.bf16 %v990, %v990
  %v1042 = vpack.c.bf16 %v991, %v991
  %v1043 = vpack.c.bf16 %v992, %v992
  %v1044 = vld [vmem:[%s6 + $0x3] sm:$0x1]
  %v1045 = vperm.slane %v1044, 0
  %v1094 = vunpack.c.l.b16 %v993
  %v1095 = vunpack.c.l.b16 %v994
  %v1096 = vunpack.c.l.b16 %v995
  %v1097 = vunpack.c.l.b16 %v996
  %v1098 = vunpack.c.l.b16 %v997
  %v1099 = vunpack.c.l.b16 %v998
  %v1100 = vunpack.c.l.b16 %v999
  %v1101 = vunpack.c.l.b16 %v1000
  %v1102 = vunpack.c.l.b16 %v1001
  %v1103 = vunpack.c.l.b16 %v1002
  %v1104 = vunpack.c.l.b16 %v1003
  %v1105 = vunpack.c.l.b16 %v1004
  %v1106 = vunpack.c.l.b16 %v1005
  %v1107 = vunpack.c.l.b16 %v1006
  %v1108 = vunpack.c.l.b16 %v1007
  %v1109 = vunpack.c.l.b16 %v1008
  %v1110 = vunpack.c.l.b16 %v1009
  %v1111 = vunpack.c.l.b16 %v1010
  %v1112 = vunpack.c.l.b16 %v1011
  %v1113 = vunpack.c.l.b16 %v1012
  %v1114 = vunpack.c.l.b16 %v1013
  %v1115 = vunpack.c.l.b16 %v1014
  %v1116 = vunpack.c.l.b16 %v1015
  %v1117 = vunpack.c.l.b16 %v1016
  %v1118 = vunpack.c.l.b16 %v1017
  %v1119 = vunpack.c.l.b16 %v1018
  %v1120 = vunpack.c.l.b16 %v1019
  %v1121 = vunpack.c.l.b16 %v1020
  %v1122 = vunpack.c.l.b16 %v1021
  %v1123 = vunpack.c.l.b16 %v1022
  %v1124 = vunpack.c.l.b16 %v1023
  %v1125 = vunpack.c.l.b16 %v1024
  %v1126 = vunpack.c.l.b16 %v1025
  %v1127 = vunpack.c.l.b16 %v1026
  %v1128 = vunpack.c.l.b16 %v1027
  %v1129 = vunpack.c.l.b16 %v1028
  %v1130 = vunpack.c.l.b16 %v1029
  %v1131 = vunpack.c.l.b16 %v1030
  %v1132 = vunpack.c.l.b16 %v1031
  %v1133 = vunpack.c.l.b16 %v1032
  %v1134 = vunpack.c.l.b16 %v1033
  %v1135 = vunpack.c.l.b16 %v1034
  %v1136 = vunpack.c.l.b16 %v1035
  %v1137 = vunpack.c.l.b16 %v1036
  %v1138 = vunpack.c.l.b16 %v1037
  %v1139 = vunpack.c.l.b16 %v1038
  %v1140 = vunpack.c.l.b16 %v1039
  %v1141 = vunpack.c.l.b16 %v1040
  %v1142 = vpack.c.b16 %v1095, %v1094
  %v1143 = vpack.c.b16 %v1097, %v1096
  %v1144 = vpack.c.b16 %v1099, %v1098
  %v1145 = vpack.c.b16 %v1101, %v1100
  %v1146 = vpack.c.b16 %v1103, %v1102
  %v1147 = vpack.c.b16 %v1105, %v1104
  %v1148 = vpack.c.b16 %v1107, %v1106
  %v1149 = vpack.c.b16 %v1109, %v1108
  %v1150 = vpack.c.b16 %v1111, %v1110
  %v1151 = vpack.c.b16 %v1113, %v1112
  %v1152 = vpack.c.b16 %v1115, %v1114
  %v1153 = vpack.c.b16 %v1117, %v1116
  %v1154 = vpack.c.b16 %v1119, %v1118
  %v1155 = vpack.c.b16 %v1121, %v1120
  %v1156 = vpack.c.b16 %v1123, %v1122
  %v1157 = vpack.c.b16 %v1125, %v1124
  %v1158 = vpack.c.b16 %v1127, %v1126
  %v1159 = vpack.c.b16 %v1129, %v1128
  %v1160 = vpack.c.b16 %v1131, %v1130
  %v1161 = vpack.c.b16 %v1133, %v1132
  %v1162 = vpack.c.b16 %v1135, %v1134
  %v1163 = vpack.c.b16 %v1137, %v1136
  %v1164 = vpack.c.b16 %v1139, %v1138
  %v1165 = vpack.c.b16 %v1141, %v1140
  %1190 = vmatpush.bf16.msra.mxu0 %v1149
  %1191 = vmatpush.bf16.msra.mxu0 %v1148
  %1192 = vmatpush.bf16.msra.mxu0 %v1147
  %1193 = vmatpush.bf16.msra.mxu0 %v1146
  %1194 = vmatpush.bf16.msra.mxu0 %v1145
  %1195 = vmatpush.bf16.msra.mxu0 %v1144
  %1196 = vmatpush.bf16.msra.mxu0 %v1143
  %1197 = vmatpush.bf16.msra.mxu0 %v1142
  %1198 = vmatmul.bf16.gmra.mxu0 %v1041
  %v1199 = vpop.f32.mrf.mxu0
  %v1200 = vadd.f32 %v1045, %v1199
  %v1201 = vpop.f32.mrf.mxu0
  %1202 = vdwg.mxu0
  %1203 = vmatpush.bf16.msra.mxu0 %v1157
  %1204 = vmatpush.bf16.msra.mxu0 %v1156
  %1205 = vmatpush.bf16.msra.mxu0 %v1155
  %1206 = vmatpush.bf16.msra.mxu0 %v1154
  %1207 = vmatpush.bf16.msra.mxu0 %v1153
  %1208 = vmatpush.bf16.msra.mxu0 %v1152
  %1209 = vmatpush.bf16.msra.mxu0 %v1151
  %1210 = vmatpush.bf16.msra.mxu0 %v1150
  %1211 = vmatmul.bf16.gmra.mxu0 %v1042
  %v1212 = vpop.f32.mrf.mxu0
  %v1213 = vadd.f32 %v1200, %v1212
  %v1214 = vpop.f32.mrf.mxu0
  %1215 = vdwg.mxu0
  %1216 = vmatpush.bf16.msra.mxu0 %v1165
  %1217 = vmatpush.bf16.msra.mxu0 %v1164
  %1218 = vmatpush.bf16.msra.mxu0 %v1163
  %1219 = vmatpush.bf16.msra.mxu0 %v1162
  %1220 = vmatpush.bf16.msra.mxu0 %v1161
  %1221 = vmatpush.bf16.msra.mxu0 %v1160
  %1222 = vmatpush.bf16.msra.mxu0 %v1159
  %1223 = vmatpush.bf16.msra.mxu0 %v1158
  %1224 = vmatmul.bf16.gmra.mxu0 %v1043
  %v1225 = vpop.f32.mrf.mxu0
  %v1226 = vadd.f32 %v1213, %v1225
  %v1227 = vpop.f32.mrf.mxu0
  %1228 = vdwg.mxu0
  %1229 = vst [vmem:[%s7] sm:$0x3] %v1226
  // Predicated region
  $region30: #{grid_world_mlp_forward.1} parent=0 // pred_check
    _
  $region31: #{grid_world_mlp_forward.1} parent=0 // pred_check_branch
    %1231 = sbr.rel (0) target = $region33
  $region32: #{grid_world_mlp_forward.1} parent=0 // pred_region
    _
  $region33: #{grid_world_mlp_forward.1} parent=0 // pred_fallthru
    _
  // Predicated region
  $region34: #{grid_world_mlp_forward.1} parent=0 // pred_check
    _
  $region35: #{grid_world_mlp_forward.1} parent=0 // pred_check_branch
    %1233 = sbr.rel (0) target = $region37
  $region36: #{grid_world_mlp_forward.1} parent=0 // pred_region
    _
  $region37: #{grid_world_mlp_forward.1} parent=0 // pred_fallthru
    _

</llo_original>
